<compile_context>
chip_gen: v5e
topology: v5e:2x2
jax: 0.10.0
libtpu: 0.0.40
codegen_flags: <defaults>
</compile_context>

<pallas_src>
import functools

import jax
import jax.numpy as jnp
from jax import lax
from jax.experimental import pallas as pl
from jax.experimental.pallas import tpu as pltpu

_BETA = 1.0 / 9.0
_DEFAULT_BLOCK_ROWS = 256     # sublane rows per grid step (multiple of 8)
_DEFAULT_LANE_WIDTH = 1024    # lanes per row (multiple of 128, even)


def _est_loss_kernel(vals_ref, gts_ref, out_ref, sum_acc, cnt_acc, *,
                     loss_type, bidirection, c, valid_elems, block_elems,
                     has_tail):
    """One dense (R, W) flat block: mask -> encode -> loss -> masked accumulate."""
    step = pl.program_id(0)

    @pl.when(step == 0)
    def _init():
        sum_acc[...] = jnp.zeros_like(sum_acc)
        cnt_acc[...] = jnp.zeros_like(cnt_acc)

    vals = vals_ref[...].astype(jnp.float32)       # (R, W) flat row-major view
    gts = gts_ref[...].astype(jnp.float32)         # (R, W)
    r, w = vals.shape

    if (c == 2) or has_tail:
        lane = lax.broadcasted_iota(jnp.int32, (r, w), 1)

    # Per-element "effective" mask: flat element f belongs to sample f // c and
    # is kept iff gts[sample, 1] != 1 (2-D) / gts[sample] != 1 (1-D).
    is_col0 = None
    if c == 1:
        mvals = gts
    else:
        # C == 2: flat layout interleaves (col0, col1) on even/odd lanes; W is
        # even so a sample never straddles a row boundary.
        is_col0 = (lane & 1) == 0
        nxt = pltpu.roll(gts, shift=w - 1, axis=1)   # nxt[i] == gts[i + 1]
        mvals = jnp.where(is_col0, nxt, gts)
    mask = mvals != 1.0

    if has_tail:
        # Kill pad / partial-block elements: global flat index must be < N*C.
        row = lax.broadcasted_iota(jnp.int32, (r, w), 0)
        local_flat = row * w + lane
        bound = valid_elems - step * block_elems     # >= block_elems on non-tail steps
        mask = jnp.logical_and(mask, local_flat < bound)

    # Encoder.
    if bidirection:          # C == 2: col0 -> gts / 0.2, col1 -> 2*gts - 0.4
        target = jnp.where(is_col0, gts * 5.0, 2.0 * gts - 0.4)
    else:                    # est_encode: 2*gts - 1
        target = 2.0 * gts - 1.0

    diff = vals - target
    if loss_type == "smooth_l1":
        n = jnp.abs(diff)
        elem = jnp.where(n < _BETA, (n * n) * (0.5 / _BETA), n - 0.5 * _BETA)
    elif loss_type == "l2":
        elem = diff * diff
    else:
        raise ValueError(f"unknown loss {loss_type}")

    # Element-wise accumulate (VPU only); the cross-lane reduce is deferred.
    sum_acc[...] += jnp.where(mask, elem, 0.0)
    cnt_acc[...] += mask.astype(jnp.float32)

    @pl.when(step == pl.num_programs(0) - 1)
    def _finalize():
        total = jnp.sum(sum_acc[...], axis=(0, 1), keepdims=True)   # (1, 1)
        count = jnp.sum(cnt_acc[...], axis=(0, 1), keepdims=True)   # (1, 1)
        # Fused size_average=True mean; exact divide keeps 0/0 -> NaN semantics.
        out_ref[...] = total / count


def _round_up(x, m):
    return (x + m - 1) // m * m


def est_loss(reg_vals, reg_gts, *, loss="smooth_l1", bidirection=False,
             block_rows=_DEFAULT_BLOCK_ROWS, lane_width=_DEFAULT_LANE_WIDTH):
    """JAX/Pallas equivalent of EstLoss(loss, bidirection).forward(reg_vals, reg_gts)."""
    c = reg_gts.shape[1] if reg_gts.ndim > 1 else 1
    if bidirection and c != 2:
        raise ValueError("bidirection=True requires exactly 2 regression components")
    if c not in (1, 2):
        # TODO(synk): general C>2 needs an in-kernel gather of each sample's
        # column-1 gts; only the apnet layouts (1-D and (N, 2)) are implemented.
        raise NotImplementedError("est_loss Pallas kernel supports 1-D or (N, 2) inputs")

    assert block_rows % 8 == 0
    assert lane_width % 128 == 0 and (c == 1 or lane_width % 2 == 0)

    # Flat row-major view; one minimal pad copy only if N*C % W != 0.
    flat_v = reg_vals.reshape(-1)
    flat_g = reg_gts.reshape(-1)
    n_elems = flat_v.shape[0]                       # N * C
    w = lane_width
    padded = _round_up(max(n_elems, 1), w)
    if padded != n_elems:
        flat_v = jnp.pad(flat_v, (0, padded - n_elems))
        flat_g = jnp.pad(flat_g, (0, padded - n_elems))
    rows = padded // w
    v2d = flat_v.reshape(rows, w)
    g2d = flat_g.reshape(rows, w)

    if rows <= block_rows:
        r = rows                                    # single block == full array
        num_steps = 1
    else:
        r = block_rows
        num_steps = pl.cdiv(rows, r)
    has_tail = (padded != n_elems) or (rows % r != 0)

    kernel = functools.partial(
        _est_loss_kernel, loss_type=loss, bidirection=bidirection, c=c,
        valid_elems=n_elems, block_elems=r * w, has_tail=has_tail)

    out = pl.pallas_call(
        kernel,
        out_shape=jax.ShapeDtypeStruct((1, 1), jnp.float32),
        grid=(num_steps,),
        in_specs=[
            pl.BlockSpec((r, w), lambda i: (i, 0)),
            pl.BlockSpec((r, w), lambda i: (i, 0)),
        ],
        out_specs=pl.BlockSpec((1, 1), lambda i: (0, 0)),
        scratch_shapes=[
            pltpu.VMEM((r, w), jnp.float32),   # masked loss-sum accumulator
            pltpu.VMEM((r, w), jnp.float32),   # masked element-count accumulator
        ],
        compiler_params=pltpu.CompilerParams(
            dimension_semantics=("arbitrary",),
            vmem_limit_bytes=32 * 1024 * 1024,
        ),
    )(v2d, g2d)
    return out[0, 0]


def _est_loss_ref(reg_vals, reg_gts, *, loss="smooth_l1", bidirection=False):
    """Pure-JAX reference for correctness checking."""
    if reg_gts.ndim > 1:
        eff = reg_gts[:, 1] != 1.0
        vals, gts = reg_vals, reg_gts
    else:
        eff = reg_gts != 1.0
        vals = reg_vals.reshape(-1, 1)
        gts = reg_gts.reshape(-1, 1)

    if bidirection:
        target = jnp.concatenate([gts[:, :1] / 0.2, 2.0 * gts[:, 1:2] - 0.4], axis=1)
    else:
        target = 2.0 * gts - 1.0

    diff = vals - target
    if loss == "smooth_l1":
        n = jnp.abs(diff)
        elem = jnp.where(n < _BETA, 0.5 * n * n / _BETA, n - 0.5 * _BETA)
    else:
        elem = diff * diff

    mask = jnp.broadcast_to(eff[:, None], elem.shape)
    return jnp.sum(jnp.where(mask, elem, 0.0)) / jnp.sum(mask.astype(jnp.float32))


if __name__ == "__main__":
    key = jax.random.PRNGKey(0)
    k1, k2, k3, k4, k5, k6 = jax.random.split(key, 6)

    # 2-D case; N*C deliberately not a multiple of the lane width (tail-mask path).
    N, C = 300, 2
    reg_vals = jax.random.normal(k1, (N, C), dtype=jnp.float32)
    reg_gts = jax.random.uniform(k2, (N, C), dtype=jnp.float32)
    reg_gts = reg_gts.at[::4, 1].set(1.0)           # some non-effective rows

    for cfg in (dict(loss="smooth_l1", bidirection=False),
                dict(loss="l2", bidirection=False),
                dict(loss="smooth_l1", bidirection=True)):
        out = jax.block_until_ready(est_loss(reg_vals, reg_gts, **cfg))
        ref = _est_loss_ref(reg_vals, reg_gts, **cfg)
        assert jnp.allclose(out, ref, rtol=1e-5, atol=1e-5), (cfg, out, ref)

    # Multi-step grid accumulation (small blocks); ragged (1500) and aligned (1536) tails.
    for M2 in (1500, 1536):
        v2 = jax.random.normal(k3, (M2, 2), dtype=jnp.float32)
        g2 = jax.random.uniform(k4, (M2, 2), dtype=jnp.float32)
        g2 = g2.at[::3, 1].set(1.0)
        out2 = jax.block_until_ready(
            est_loss(v2, g2, loss="smooth_l1", block_rows=8, lane_width=128))
        ref2 = _est_loss_ref(v2, g2, loss="smooth_l1")
        assert jnp.allclose(out2, ref2, rtol=1e-5, atol=1e-5), (M2, out2, ref2)

    # 1-D case.
    M = 200
    v1 = jax.random.normal(k5, (M,), dtype=jnp.float32)
    g1 = jax.random.uniform(k6, (M,), dtype=jnp.float32)
    g1 = g1.at[::5].set(1.0)
    out1 = jax.block_until_ready(est_loss(v1, g1, loss="smooth_l1"))
    ref1 = _est_loss_ref(v1, g1, loss="smooth_l1")
    assert jnp.allclose(out1, ref1, rtol=1e-5, atol=1e-5), (out1, ref1)

    print("KERNEL_OK")
</pallas_src>

<mosaic_0001>
module attributes {stable_mosaic.version = 11 : i64} {
  func.func @_est_loss_kernel(%arg0: i32, %arg1: memref<1x1024xf32, #tpu.memory_space<vmem>>, %arg2: memref<1x1024xf32, #tpu.memory_space<vmem>>, %arg3: memref<1x1xf32, #tpu.memory_space<vmem>>, %arg4: memref<1x1024xf32, #tpu.memory_space<vmem>>, %arg5: memref<1x1024xf32, #tpu.memory_space<vmem>>) attributes {dimension_semantics = [#tpu.dimension_semantics<arbitrary>], iteration_bounds = array<i64: 1>, scalar_prefetch = 0 : i64, scratch_operands = 2 : i64, tpu.core_type = #tpu.core_type<tc>, window_params = [{transform_indices = @transform_0, window_bounds = array<i64: 1, 1024>}, {transform_indices = @transform_1, window_bounds = array<i64: 1, 1024>}, {pipeline_mode = #tpu.pipeline_mode<synchronous>, transform_indices = @transform_2, window_bounds = array<i64: 1, 1>}]} {
    %c0_i32 = arith.constant 0 : i32
    %0 = arith.cmpi eq, %arg0, %c0_i32 : i32
    %1 = arith.extui %0 : i1 to i32
    %c0_i32_0 = arith.constant 0 : i32
    %2 = arith.cmpi ne, %1, %c0_i32_0 : i32
    scf.if %2 {
      %cst_22 = arith.constant 0.000000e+00 : f32
      %50 = vector.broadcast %cst_22 : f32 to vector<1x1024xf32>
      %c0_23 = arith.constant 0 : index
      %c0_24 = arith.constant 0 : index
      %51 = vector.load %arg4[%c0_23, %c0_24] : memref<1x1024xf32, #tpu.memory_space<vmem>>, vector<1x1024xf32>
      tpu.vector_store %arg4[%c0_23, %c0_24], %50 {strides = array<i32>} : memref<1x1024xf32, #tpu.memory_space<vmem>>, vector<1x1024xf32>,
      %cst_25 = arith.constant 0.000000e+00 : f32
      %52 = vector.broadcast %cst_25 : f32 to vector<1x1024xf32>
      %c0_26 = arith.constant 0 : index
      %c0_27 = arith.constant 0 : index
      %53 = vector.load %arg5[%c0_26, %c0_27] : memref<1x1024xf32, #tpu.memory_space<vmem>>, vector<1x1024xf32>
      tpu.vector_store %arg5[%c0_26, %c0_27], %52 {strides = array<i32>} : memref<1x1024xf32, #tpu.memory_space<vmem>>, vector<1x1024xf32>,
    } else {
    }
    %c0 = arith.constant 0 : index
    %c0_1 = arith.constant 0 : index
    %3 = vector.load %arg1[%c0, %c0_1] : memref<1x1024xf32, #tpu.memory_space<vmem>>, vector<1x1024xf32>
    %c0_2 = arith.constant 0 : index
    %c0_3 = arith.constant 0 : index
    %4 = vector.load %arg2[%c0_2, %c0_3] : memref<1x1024xf32, #tpu.memory_space<vmem>>, vector<1x1024xf32>
    %5 = tpu.iota {dimensions = array<i32: 1>} : vector<1x1024xi32>
    %c1_i32 = arith.constant 1 : i32
    %6 = vector.broadcast %c1_i32 : i32 to vector<1x1024xi32>
    %7 = arith.andi %5, %6 : vector<1x1024xi32>
    %c0_i32_4 = arith.constant 0 : i32
    %8 = vector.broadcast %c0_i32_4 : i32 to vector<1x1024xi32>
    %9 = arith.cmpi eq, %7, %8 : vector<1x1024xi32>
    %c1023_i32 = arith.constant 1023 : i32
    %10 = tpu.dynamic_rotate %4 by %c1023_i32 dim 1 : vector<1x1024xf32>, i32 -> vector<1x1024xf32>
    %11 = arith.select %9, %10, %4 : vector<1x1024xi1>, vector<1x1024xf32>
    %cst = arith.constant 1.000000e+00 : f32
    %12 = vector.broadcast %cst : f32 to vector<1x1024xf32>
    %13 = arith.cmpf one, %11, %12 : vector<1x1024xf32>
    %14 = tpu.iota {dimensions = array<i32: 0>} : vector<1x1024xi32>
    %c1024_i32 = arith.constant 1024 : i32
    %15 = vector.broadcast %c1024_i32 : i32 to vector<1x1024xi32>
    %16 = arith.muli %14, %15 : vector<1x1024xi32>
    %17 = arith.addi %16, %5 : vector<1x1024xi32>
    %c1024_i32_5 = arith.constant 1024 : i32
    %18 = arith.muli %arg0, %c1024_i32_5 : i32
    %c600_i32 = arith.constant 600 : i32
    %19 = arith.subi %c600_i32, %18 : i32
    %20 = vector.broadcast %19 : i32 to vector<1x1024xi32>
    %21 = arith.cmpi slt, %17, %20 : vector<1x1024xi32>
    %22 = arith.andi %13, %21 : vector<1x1024xi1>
    %cst_6 = arith.constant 2.000000e+00 : f32
    %23 = vector.broadcast %cst_6 : f32 to vector<1x1024xf32>
    %24 = arith.mulf %23, %4 : vector<1x1024xf32>
    %cst_7 = arith.constant 1.000000e+00 : f32
    %25 = vector.broadcast %cst_7 : f32 to vector<1x1024xf32>
    %26 = arith.subf %24, %25 : vector<1x1024xf32>
    %27 = arith.subf %3, %26 : vector<1x1024xf32>
    %28 = math.absf %27 : vector<1x1024xf32>
    %cst_8 = arith.constant 0.111111112 : f32
    %29 = vector.broadcast %cst_8 : f32 to vector<1x1024xf32>
    %30 = arith.cmpf olt, %28, %29 : vector<1x1024xf32>
    %31 = arith.mulf %28, %28 : vector<1x1024xf32>
    %cst_9 = arith.constant 4.500000e+00 : f32
    %32 = vector.broadcast %cst_9 : f32 to vector<1x1024xf32>
    %33 = arith.mulf %31, %32 : vector<1x1024xf32>
    %cst_10 = arith.constant 0.055555556 : f32
    %34 = vector.broadcast %cst_10 : f32 to vector<1x1024xf32>
    %35 = arith.subf %28, %34 : vector<1x1024xf32>
    %36 = arith.select %30, %33, %35 : vector<1x1024xi1>, vector<1x1024xf32>
    %c0_11 = arith.constant 0 : index
    %c0_12 = arith.constant 0 : index
    %37 = vector.load %arg4[%c0_11, %c0_12] : memref<1x1024xf32, #tpu.memory_space<vmem>>, vector<1x1024xf32>
    %cst_13 = arith.constant 0.000000e+00 : f32
    %38 = vector.broadcast %cst_13 : f32 to vector<1x1024xf32>
    %39 = arith.select %22, %36, %38 : vector<1x1024xi1>, vector<1x1024xf32>
    %40 = arith.addf %37, %39 : vector<1x1024xf32>
    %c0_14 = arith.constant 0 : index
    %c0_15 = arith.constant 0 : index
    %41 = vector.load %arg4[%c0_14, %c0_15] : memref<1x1024xf32, #tpu.memory_space<vmem>>, vector<1x1024xf32>
    tpu.vector_store %arg4[%c0_14, %c0_15], %40 {strides = array<i32>} : memref<1x1024xf32, #tpu.memory_space<vmem>>, vector<1x1024xf32>,
    %c0_16 = arith.constant 0 : index
    %c0_17 = arith.constant 0 : index
    %42 = vector.load %arg5[%c0_16, %c0_17] : memref<1x1024xf32, #tpu.memory_space<vmem>>, vector<1x1024xf32>
    %43 = arith.extui %22 : vector<1x1024xi1> to vector<1x1024xi32>
    %44 = arith.sitofp %43 : vector<1x1024xi32> to vector<1x1024xf32>
    %45 = arith.addf %42, %44 : vector<1x1024xf32>
    %c0_18 = arith.constant 0 : index
    %c0_19 = arith.constant 0 : index
    %46 = vector.load %arg5[%c0_18, %c0_19] : memref<1x1024xf32, #tpu.memory_space<vmem>>, vector<1x1024xf32>
    tpu.vector_store %arg5[%c0_18, %c0_19], %45 {strides = array<i32>} : memref<1x1024xf32, #tpu.memory_space<vmem>>, vector<1x1024xf32>,
    %c0_i32_20 = arith.constant 0 : i32
    %47 = arith.cmpi eq, %arg0, %c0_i32_20 : i32
    %48 = arith.extui %47 : i1 to i32
    %c0_i32_21 = arith.constant 0 : i32
    %49 = arith.cmpi ne, %48, %c0_i32_21 : i32
    scf.if %49 {
      %c0_22 = arith.constant 0 : index
      %c0_23 = arith.constant 0 : index
      %50 = vector.load %arg4[%c0_22, %c0_23] : memref<1x1024xf32, #tpu.memory_space<vmem>>, vector<1x1024xf32>
      %51 = vector.shape_cast %50 : vector<1x1024xf32> to vector<1x1x1024xf32>
      %cst_24 = arith.constant dense<0.000000e+00> : vector<1xf32>
      %52 = vector.multi_reduction <add>, %51, %cst_24 [1, 2] : vector<1x1x1024xf32> to vector<1xf32>
      %53 = vector.shape_cast %52 : vector<1xf32> to vector<1x1x1xf32>
      %54 = vector.extract %53[0, 0, 0] : f32 from vector<1x1x1xf32>
      %55 = vector.broadcast %54 : f32 to vector<1x1xf32>
      %c0_25 = arith.constant 0 : index
      %c0_26 = arith.constant 0 : index
      %56 = vector.load %arg5[%c0_25, %c0_26] : memref<1x1024xf32, #tpu.memory_space<vmem>>, vector<1x1024xf32>
      %57 = vector.shape_cast %56 : vector<1x1024xf32> to vector<1x1x1024xf32>
      %cst_27 = arith.constant dense<0.000000e+00> : vector<1xf32>
      %58 = vector.multi_reduction <add>, %57, %cst_27 [1, 2] : vector<1x1x1024xf32> to vector<1xf32>
      %59 = vector.shape_cast %58 : vector<1xf32> to vector<1x1x1xf32>
      %60 = vector.extract %59[0, 0, 0] : f32 from vector<1x1x1xf32>
      %61 = vector.broadcast %60 : f32 to vector<1x1xf32>
      %62 = arith.divf %55, %61 : vector<1x1xf32>
      %c0_28 = arith.constant 0 : index
      %c0_29 = arith.constant 0 : index
      %63 = vector.load %arg3[%c0_28, %c0_29] : memref<1x1xf32, #tpu.memory_space<vmem>>, vector<1x1xf32>
      tpu.vector_store %arg3[%c0_28, %c0_29], %62 {strides = array<i32>} : memref<1x1xf32, #tpu.memory_space<vmem>>, vector<1x1xf32>,
    } else {
    }
    return
  }
  func.func @transform_0(%arg0: i32) -> (i32, i32) {
    %c0_i32 = arith.constant 0 : i32
    %c0_i32_0 = arith.constant 0 : i32
    return %arg0, %c0_i32 : i32, i32
  }
  func.func @transform_1(%arg0: i32) -> (i32, i32) {
    %c0_i32 = arith.constant 0 : i32
    %c0_i32_0 = arith.constant 0 : i32
    return %arg0, %c0_i32 : i32, i32
  }
  func.func @transform_2(%arg0: i32) -> (i32, i32) {
    %c0_i32 = arith.constant 0 : i32
    %c0_i32_0 = arith.constant 0 : i32
    %c0_i32_1 = arith.constant 0 : i32
    return %c0_i32, %c0_i32_0 : i32, i32
  }
}

</mosaic_0001>

<llo_original>
// kernel: tpu_custom_call.1
$region0: #{tpu_custom_call.1}
  #allocation0 [shape = 'u32[]', space=smem, size = 0x4, offset = 0x4, fixed_abs, tag = 'smem constant byte address 0x4 - core index']
  #allocation1 [shape = 'u32[72,128]{1,0:T(1,128)}', space=vmem, size = 0x9000, scoped, tag = 'internal scratch']
  #allocation2 [shape = 'f32[1,1024]{1,0:T(1,128)}', space=vmem, size = 0x1000, scoped, tag = 'scratch operand']
  #allocation3 [shape = 'f32[1,1024]{1,0:T(1,128)}', space=vmem, size = 0x1000, scoped, tag = 'scratch operand']
  %s0 = inlined_call_operand.hbm [shape: f32[1,1024], index: 0, kind: input, shape index: {}]
  %s1 = inlined_call_operand.hbm [shape: f32[1,1024], index: 1, kind: input, shape index: {}]
  %s2 = inlined_call_operand.hbm [shape: f32[1,1], index: 2, kind: output, shape index: {}]
  %s3 = sld [smem:[#allocation0]]
  $region34: #{tpu_custom_call.1} parent=0
    _
  %s5 = ssub.s32 1, %s3
  %s6 = scalar_select 0, %s5, %s3
  $region1: #{tpu_custom_call.1} parent=0
    #allocation4 [shape = 'u8[4096]{0}', space=vmem, size = 0x1000, scoped, tag = 'input window, operand 0, single buffered']
    #allocation5 [shape = 's32[1]{0}', space=sflag, size = 0x4, scoped, tag = 'scoped memory for tpu_custom_call.1']
    #allocation6 [shape = 's32[1]{0}', space=sflag, size = 0x4, scoped, tag = 'scoped memory for tpu_custom_call.1']
    #allocation7 [shape = 'u8[4096]{0}', space=vmem, size = 0x1000, scoped, tag = 'input window, operand 1, single buffered']
    #allocation8 [shape = 's32[1]{0}', space=sflag, size = 0x4, scoped, tag = 'scoped memory for tpu_custom_call.1']
    #allocation9 [shape = 'u8[512]{0}', space=vmem, size = 0x400, scoped, tag = 'output window, operand 0, single buffered']
    %7 = vsyncpa [#allocation5], 0
    %8 = vsyncpa [#allocation8], 0
    %9 = vsyncpa [#allocation6], 0
    // Predicated region
    $region2: #{tpu_custom_call.1} parent=1 // pred_check
      _
    $region3: #{tpu_custom_call.1} parent=1 // pred_check_branch
      %11 = sbr.rel (0) target = $region5
    $region4: #{tpu_custom_call.1} parent=1 // pred_region
      %13 = vsyncadd [#allocation5], 0
      %s15 = sshll.u32 %s0, 4
      %s16 = int_to_ptr.hbm [resolvable:$true] %s15
      %s17 = sshll.u32 [#allocation4], 4
      %s18 = int_to_ptr.vmem [resolvable:$true] %s17
      %20 = dma.hbm_to_vmem [thread:$0]  %s16, 128, %s18, [#allocation5]
    $region5: #{tpu_custom_call.1} parent=1 // pred_fallthru
      _
    // Predicated region
    $region6: #{tpu_custom_call.1} parent=1 // pred_check
      _
    $region7: #{tpu_custom_call.1} parent=1 // pred_check_branch
      %22 = sbr.rel (0) target = $region9
    $region8: #{tpu_custom_call.1} parent=1 // pred_region
      %24 = vsyncadd [#allocation8], 0
      %s26 = sshll.u32 %s1, 4
      %s27 = int_to_ptr.hbm [resolvable:$true] %s26
      %s28 = sshll.u32 [#allocation7], 4
      %s29 = int_to_ptr.vmem [resolvable:$true] %s28
      %31 = dma.hbm_to_vmem [thread:$0]  %s27, 128, %s29, [#allocation8]
    $region9: #{tpu_custom_call.1} parent=1 // pred_fallthru
      _
    // Predicated region
    $region10: #{tpu_custom_call.1} parent=1 // pred_check
      _
    $region11: #{tpu_custom_call.1} parent=1 // pred_check_branch
      %33 = sbr.rel (0) target = $region13
    $region12: #{tpu_custom_call.1} parent=1 // pred_region
      %35 = dma.done [#allocation5], 128
    $region13: #{tpu_custom_call.1} parent=1 // pred_fallthru
      _
    // Predicated region
    $region14: #{tpu_custom_call.1} parent=1 // pred_check
      _
    $region15: #{tpu_custom_call.1} parent=1 // pred_check_branch
      %37 = sbr.rel (0) target = $region17
    $region16: #{tpu_custom_call.1} parent=1 // pred_region
      %39 = dma.done [#allocation8], 128
    $region17: #{tpu_custom_call.1} parent=1 // pred_fallthru
      _
    %p40 = scmp.eq.s32.totalorder 0, 0
    // Predicated region
    $region18: #{tpu_custom_call.1} parent=1 // pred_check
      %p41 = pneg %p40
    $region19: #{tpu_custom_call.1} parent=1 // pred_check_branch
      %43 = sbr.rel (%p41) target = $region21
    $region20: #{tpu_custom_call.1} parent=1 // pred_region
      %44 = vst [vmem:[#allocation2] sm:$0xff] 0.0
      %45 = vst [vmem:[#allocation3] sm:$0xff] 0.0
    $region21: #{tpu_custom_call.1} parent=1 // pred_fallthru
      _
    %v46 = vld [vmem:[#allocation4] sm:$0xff]
    %v47 = vld [vmem:[#allocation7] sm:$0xff]
    %v48 = vlaneseq
    %v49 = vand.u32 %v48, 127
    %v50 = vadd.s32 %v49, 128
    %v51 = vadd.s32 %v49, 256
    %v52 = vadd.s32 %v49, 384
    %v53 = vadd.s32 %v49, 512
    %v54 = vadd.s32 %v49, 640
    %v55 = vadd.s32 %v49, 768
    %v56 = vadd.s32 %v49, 896
    %v57 = vand.u32 %v49, 1
    %v58 = vand.u32 %v50, 1
    %v59 = vand.u32 %v51, 1
    %v60 = vand.u32 %v52, 1
    %v61 = vand.u32 %v53, 1
    %v62 = vand.u32 %v54, 1
    %v63 = vand.u32 %v55, 1
    %v64 = vand.u32 %v56, 1
    %vm65 = vcmp.eq.s32.totalorder %v57, 0
    %vm66 = vcmp.eq.s32.totalorder %v58, 0
    %vm67 = vcmp.eq.s32.totalorder %v59, 0
    %vm68 = vcmp.eq.s32.totalorder %v60, 0
    %vm69 = vcmp.eq.s32.totalorder %v61, 0
    %vm70 = vcmp.eq.s32.totalorder %v62, 0
    %vm71 = vcmp.eq.s32.totalorder %v63, 0
    %vm72 = vcmp.eq.s32.totalorder %v64, 0
    %v74 = vperm.slane %v47, 0
    %v75 = vperm.slane %v47, 1
    %v76 = vperm.slane %v47, 2
    %v77 = vperm.slane %v47, 3
    %v78 = vperm.slane %v47, 4
    %v79 = vperm.slane %v47, 5
    %v80 = vperm.slane %v47, 6
    %v81 = vperm.slane %v47, 7
    %90 = vrot.lane.b32.xlu0 %v74, 127
    %v91 = vpop.permute.xlu0 %90
    %92 = vrot.lane.b32.xlu0 %v75, 127
    %v93 = vpop.permute.xlu0 %92
    %94 = vrot.lane.b32.xlu0 %v76, 127
    %v95 = vpop.permute.xlu0 %94
    %96 = vrot.lane.b32.xlu0 %v77, 127
    %v97 = vpop.permute.xlu0 %96
    %98 = vrot.lane.b32.xlu0 %v78, 127
    %v99 = vpop.permute.xlu0 %98
    %100 = vrot.lane.b32.xlu0 %v79, 127
    %v101 = vpop.permute.xlu0 %100
    %102 = vrot.lane.b32.xlu0 %v80, 127
    %v103 = vpop.permute.xlu0 %102
    %104 = vrot.lane.b32.xlu0 %v81, 127
    %v105 = vpop.permute.xlu0 %104
    %vm106 = vcmp.lt.s32.totalorder %v49, 127
    %v107 = vsel %vm106, %v103, %v105
    %v108 = vsel %vm106, %v101, %v103
    %v109 = vsel %vm106, %v99, %v101
    %v110 = vsel %vm106, %v97, %v99
    %v111 = vsel %vm106, %v95, %v97
    %v112 = vsel %vm106, %v93, %v95
    %v113 = vsel %vm106, %v91, %v93
    %v114 = vsel %vm106, %v105, %v91
    %v115 = vsel %vm65, %v113, %v74
    %v116 = vsel %vm66, %v112, %v75
    %v117 = vsel %vm67, %v111, %v76
    %v118 = vsel %vm68, %v110, %v77
    %v119 = vsel %vm69, %v109, %v78
    %v120 = vsel %vm70, %v108, %v79
    %v121 = vsel %vm71, %v107, %v80
    %v122 = vsel %vm72, %v114, %v81
    %vm123 = vcmp.ne.f32.partialorder %v115, 1.0
    %vm124 = vcmp.ne.f32.partialorder %v116, 1.0
    %vm125 = vcmp.ne.f32.partialorder %v117, 1.0
    %vm126 = vcmp.ne.f32.partialorder %v118, 1.0
    %vm127 = vcmp.ne.f32.partialorder %v119, 1.0
    %vm128 = vcmp.ne.f32.partialorder %v120, 1.0
    %vm129 = vcmp.ne.f32.partialorder %v121, 1.0
    %vm130 = vcmp.ne.f32.partialorder %v122, 1.0
    %v131 = vlaneseq
    %v132 = vshrl.u32 %v131, 7
    %v133 = vmul.u32 %v132, 1024
    %v134 = vadd.s32 %v133, %v49
    %v135 = vadd.s32 %v133, %v50
    %v136 = vadd.s32 %v133, %v51
    %v137 = vadd.s32 %v133, %v52
    %v138 = vadd.s32 %v133, %v53
    %v139 = vadd.s32 %v133, %v54
    %v140 = vadd.s32 %v133, %v55
    %v141 = vadd.s32 %v133, %v56
    %s142 = smul.u32 0, 1024
    %s143 = ssub.s32 600, %s142
    %v144 = vstv %s143
    %vm145 = vcmp.lt.s32.totalorder %v134, %v144
    %vm146 = vcmp.lt.s32.totalorder %v135, %v144
    %vm147 = vcmp.lt.s32.totalorder %v136, %v144
    %vm148 = vcmp.lt.s32.totalorder %v137, %v144
    %vm149 = vcmp.lt.s32.totalorder %v138, %v144
    %vm150 = vcmp.lt.s32.totalorder %v139, %v144
    %vm151 = vcmp.lt.s32.totalorder %v140, %v144
    %vm152 = vcmp.lt.s32.totalorder %v141, %v144
    %vm153 = vmand %vm123, %vm145
    %vm154 = vmand %vm124, %vm146
    %vm155 = vmand %vm125, %vm147
    %vm156 = vmand %vm126, %vm148
    %vm157 = vmand %vm127, %vm149
    %vm158 = vmand %vm128, %vm150
    %vm159 = vmand %vm129, %vm151
    %vm160 = vmand %vm130, %vm152
    %v161 = vmul.f32 %v47, 2.0
    %v162 = vsub.f32 %v161, 1.0
    %v163 = vsub.f32 %v46, %v162
    %v164 = vand.u32 2147483647, %v163
    %vm165 = vcmp.lt.f32.partialorder %v164, 0.11111111
    %v166 = vmul.f32 %v164, %v164
    %v167 = vmul.f32 %v166, 4.5
    %v168 = vsub.f32 %v164, 0.055555556
    %v169 = vsel %vm165, %v167, %v168
    %v170 = vld [vmem:[#allocation2] sm:$0xff]
    %v172 = vperm.slane %v169, 0
    %v173 = vperm.slane %v169, 1
    %v174 = vperm.slane %v169, 2
    %v175 = vperm.slane %v169, 3
    %v176 = vperm.slane %v169, 4
    %v177 = vperm.slane %v169, 5
    %v178 = vperm.slane %v169, 6
    %v179 = vperm.slane %v169, 7
    %v188 = vsel %vm153, %v172, 0.0
    %v189 = vsel %vm154, %v173, 0.0
    %v190 = vsel %vm155, %v174, 0.0
    %v191 = vsel %vm156, %v175, 0.0
    %v192 = vsel %vm157, %v176, 0.0
    %v193 = vsel %vm158, %v177, 0.0
    %v194 = vsel %vm159, %v178, 0.0
    %v195 = vsel %vm160, %v179, 0.0
    %v204 = vrot.slane %v189, 7
    %v205 = vrot.slane %v190, 6
    %v206 = vrot.slane %v191, 5
    %v207 = vrot.slane %v192, 4
    %v208 = vrot.slane %v193, 3
    %v209 = vrot.slane %v194, 2
    %v210 = vrot.slane %v195, 1
    %vm211 = vcmask 1040384
    %v212 = vsel %vm211, %v188, %v204
    %vm213 = vcmask 1042434
    %v214 = vsel %vm213, %v205, %v206
    %vm215 = vcmask 1041408
    %v216 = vsel %vm215, %v212, %v214
    %vm217 = vcmask 1044484
    %v218 = vsel %vm217, %v207, %v208
    %vm219 = vcmask 1046534
    %v220 = vsel %vm219, %v209, %v210
    %vm221 = vcmask 1045508
    %v222 = vsel %vm221, %v218, %v220
    %vm223 = vcmask 1043456
    %v224 = vsel %vm223, %v216, %v222
    %v226 = vadd.f32 %v170, %v224
    %227 = vst [vmem:[#allocation2] sm:$0xff] %v226
    %v228 = vld [vmem:[#allocation3] sm:$0xff]
    %v229 = vsel %vm153, 1, 0
    %v230 = vsel %vm154, 1, 0
    %v231 = vsel %vm155, 1, 0
    %v232 = vsel %vm156, 1, 0
    %v233 = vsel %vm157, 1, 0
    %v234 = vsel %vm158, 1, 0
    %v235 = vsel %vm159, 1, 0
    %v236 = vsel %vm160, 1, 0
    %v237 = vcvt.s32.f32 %v229
    %v238 = vcvt.s32.f32 %v230
    %v239 = vcvt.s32.f32 %v231
    %v240 = vcvt.s32.f32 %v232
    %v241 = vcvt.s32.f32 %v233
    %v242 = vcvt.s32.f32 %v234
    %v243 = vcvt.s32.f32 %v235
    %v244 = vcvt.s32.f32 %v236
    %v253 = vrot.slane %v238, 7
    %v254 = vrot.slane %v239, 6
    %v255 = vrot.slane %v240, 5
    %v256 = vrot.slane %v241, 4
    %v257 = vrot.slane %v242, 3
    %v258 = vrot.slane %v243, 2
    %v259 = vrot.slane %v244, 1
    %v260 = vsel %vm211, %v237, %v253
    %v261 = vsel %vm213, %v254, %v255
    %v262 = vsel %vm215, %v260, %v261
    %v263 = vsel %vm217, %v256, %v257
    %v264 = vsel %vm219, %v258, %v259
    %v265 = vsel %vm221, %v263, %v264
    %v266 = vsel %vm223, %v262, %v265
    %v268 = vadd.f32 %v228, %v266
    %269 = vst [vmem:[#allocation3] sm:$0xff] %v268
    // Predicated region
    $region22: #{tpu_custom_call.1} parent=1 // pred_check
      %p270 = pneg %p40
    $region23: #{tpu_custom_call.1} parent=1 // pred_check_branch
      %272 = sbr.rel (%p270) target = $region25
    $region24: #{tpu_custom_call.1} parent=1 // pred_region
      %v273 = vld [vmem:[#allocation2] sm:$0xff]
      %v275 = vperm.slane %v273, 0
      %v276 = vperm.slane %v273, 1
      %v277 = vperm.slane %v273, 2
      %v278 = vperm.slane %v273, 3
      %v279 = vperm.slane %v273, 4
      %v280 = vperm.slane %v273, 5
      %v281 = vperm.slane %v273, 6
      %v282 = vperm.slane %v273, 7
      %v291 = vsel %vm211, %v275, 0.0
      %v292 = vsel %vm211, %v276, 0.0
      %v293 = vadd.f32 %v291, %v292
      %v294 = vsel %vm211, %v277, 0.0
      %v295 = vadd.f32 %v293, %v294
      %v296 = vsel %vm211, %v278, 0.0
      %v297 = vadd.f32 %v295, %v296
      %v298 = vsel %vm211, %v279, 0.0
      %v299 = vadd.f32 %v297, %v298
      %v300 = vsel %vm211, %v280, 0.0
      %v301 = vadd.f32 %v299, %v300
      %v302 = vsel %vm211, %v281, 0.0
      %v303 = vadd.f32 %v301, %v302
      %v304 = vsel %vm211, %v282, 0.0
      %v305 = vadd.f32 %v303, %v304
      %306 = vadd.xlane.f32.xlu0 %v305
      %v307 = vpop.xlane.xlu0 %306
      %v308 = vrot.slane %v307, 4
      %v309 = vadd.f32 %v307, %v308
      %v310 = vrot.slane %v309, 2
      %v311 = vadd.f32 %v309, %v310
      %v312 = vrot.slane %v311, 1
      %v313 = vadd.f32 %v311, %v312
      %s314 = vtos %v313
      %v315 = vstv %s314
      %v316 = vld [vmem:[#allocation3] sm:$0xff]
      %v318 = vperm.slane %v316, 0
      %v319 = vperm.slane %v316, 1
      %v320 = vperm.slane %v316, 2
      %v321 = vperm.slane %v316, 3
      %v322 = vperm.slane %v316, 4
      %v323 = vperm.slane %v316, 5
      %v324 = vperm.slane %v316, 6
      %v325 = vperm.slane %v316, 7
      %v334 = vsel %vm211, %v318, 0.0
      %v335 = vsel %vm211, %v319, 0.0
      %v336 = vadd.f32 %v334, %v335
      %v337 = vsel %vm211, %v320, 0.0
      %v338 = vadd.f32 %v336, %v337
      %v339 = vsel %vm211, %v321, 0.0
      %v340 = vadd.f32 %v338, %v339
      %v341 = vsel %vm211, %v322, 0.0
      %v342 = vadd.f32 %v340, %v341
      %v343 = vsel %vm211, %v323, 0.0
      %v344 = vadd.f32 %v342, %v343
      %v345 = vsel %vm211, %v324, 0.0
      %v346 = vadd.f32 %v344, %v345
      %v347 = vsel %vm211, %v325, 0.0
      %v348 = vadd.f32 %v346, %v347
      %349 = vadd.xlane.f32.xlu0 %v348
      %v350 = vpop.xlane.xlu0 %349
      %v351 = vrot.slane %v350, 4
      %v352 = vadd.f32 %v350, %v351
      %v353 = vrot.slane %v352, 2
      %v354 = vadd.f32 %v352, %v353
      %v355 = vrot.slane %v354, 1
      %v356 = vadd.f32 %v354, %v355
      %s357 = vtos %v356
      %v358 = vstv %s357
      %v359 = vrcp.pop %v358
      %v360 = vmul.f32 %v358, %v359
      %v361 = vsub.f32 1.0, %v360
      %v362 = vmul.f32 %v359, %v361
      %v363 = vadd.f32 %v359, %v362
      %vm364 = vweird.f32 %v358
      %vm365 = vweird.f32 %v359
      %vm366 = vmor %vm364, %vm365
      %v367 = vsel %vm366, %v359, %v363
      %v368 = vand.u32 2147483647, %v358
      %vm369 = vcmp.eq.f32.partialorder %v368, 8.507059e+37
      %v370 = vand.u32 %v358, 2147483648
      %v371 = vor.u32 1.1754944e-38, %v370
      %v372 = vsel %vm369, %v371, %v367
      %v373 = vmul.f32 %v315, %v372
      %vm374 = vcmask 0
      %375 = vst.msk [vmem:[#allocation9] sm:$0x1] %vm374, %v373
    $region25: #{tpu_custom_call.1} parent=1 // pred_fallthru
      _
    // Predicated region
    $region26: #{tpu_custom_call.1} parent=1 // pred_check
      _
    $region27: #{tpu_custom_call.1} parent=1 // pred_check_branch
      %377 = sbr.rel (0) target = $region29
    $region28: #{tpu_custom_call.1} parent=1 // pred_region
      %379 = vsyncadd [#allocation6], 0
      %s381 = sshll.u32 [#allocation9], 4
      %s382 = int_to_ptr.vmem [resolvable:$true] %s381
      %s383 = sshll.u32 %s2, 4
      %s384 = int_to_ptr.hbm [resolvable:$true] %s383
      %386 = dma.vmem_to_hbm [thread:$0]  %s382, 16, %s384, [#allocation6]
    $region29: #{tpu_custom_call.1} parent=1 // pred_fallthru
      _
    // Predicated region
    $region30: #{tpu_custom_call.1} parent=1 // pred_check
      _
    $region31: #{tpu_custom_call.1} parent=1 // pred_check_branch
      %388 = sbr.rel (0) target = $region33
    $region32: #{tpu_custom_call.1} parent=1 // pred_region
      %390 = dma.done [#allocation6], 16
    $region33: #{tpu_custom_call.1} parent=1 // pred_fallthru
      _
    %391 = vsyncpa [#allocation5], 1
    %392 = vsyncpa [#allocation8], 1
    %393 = vsyncpa [#allocation6], 1

</llo_original>
